<compile_context>
chip_gen: v5e
topology: v5e:2x2
jax: 0.10.0
libtpu: 0.0.40
codegen_flags: <defaults>
</compile_context>

<pallas_src>
import functools

import jax
import jax.numpy as jnp
from jax import lax
from jax.experimental import pallas as pl
from jax.experimental.pallas import tpu as pltpu

GAMMA = 2.0  # module default; kernel uses an explicit square for gamma == 2


def _focal_loss_kernel(x_ref, t_ref, o_ref, acc_ref, *, n_rows, inv_n):
    # x_ref: (TN, C) logits block, t_ref: (TN, 1) int32 targets block
    # o_ref: (1, 1) f32 loss, acc_ref: (1, 1) f32 running sum (VMEM scratch)
    i = pl.program_id(0)

    @pl.when(i == 0)
    def _():
        acc_ref[...] = jnp.zeros_like(acc_ref)

    x = x_ref[...].astype(jnp.float32)                       # (TN, C)
    tn = x.shape[0]

    # Numerically stable log-softmax pieces along the class (lane) axis.
    m = jnp.max(x, axis=-1, keepdims=True)                    # (TN, 1)
    shifted = x - m                                           # (TN, C)
    lse = jnp.log(jnp.sum(jnp.exp(shifted), axis=-1, keepdims=True))  # (TN, 1)

    # Gather the target column first (one-hot mask-sum), then do the cheap
    # per-row math: logp_t, p_t, (1 - p_t)^2 * logp_t  -- all (TN, 1).
    t = t_ref[...]                                            # (TN, 1) int32
    col = lax.broadcasted_iota(jnp.int32, shifted.shape, 1)
    picked = jnp.sum(jnp.where(col == t, shifted, 0.0),
                     axis=-1, keepdims=True)                  # (TN, 1)
    logp_t = picked - lse                                     # log p_target
    p_t = jnp.exp(logp_t)                                     # per-row exp only
    q = 1.0 - p_t
    focal_t = q * q * logp_t                                  # gamma=2: VPU square

    # Mask rows beyond the real batch (padded edge tile).
    row = lax.broadcasted_iota(jnp.int32, (tn, 1), 0) + i * tn
    focal_t = jnp.where(row < n_rows, focal_t, 0.0)

    acc_ref[...] += jnp.sum(focal_t, keepdims=True)           # (1, 1) partial

    @pl.when(i == pl.num_programs(0) - 1)
    def _():
        # nll_loss(reduction='mean') of focal * log_prob:  loss = -(1/N) * sum
        o_ref[...] = acc_ref[...] * (-inv_n)


def focal_loss(logits: jax.Array, targets: jax.Array, *,
               block_rows: int = 256,
               max_tile_bytes: int = 4 << 20) -> jax.Array:
    """logits: (N, C) float (any float dtype); targets: (N,) ints.

    Returns the scalar f32 focal loss (gamma=2, weight=None, reduction='mean').
    """
    n, c = logits.shape
    t2d = targets.astype(jnp.int32).reshape(n, 1)

    # Row tile: multiple of 8 sublanes, capped by a per-buffer VMEM budget
    # (keeps double-buffered pipelines comfortable on v7x's 64 MiB VMEM) and
    # by the (8-rounded) batch size.
    rows_fit = max(8, (max_tile_bytes // (c * 4)) // 8 * 8)
    tn = min(block_rows, rows_fit, ((n + 7) // 8) * 8)
    grid = pl.cdiv(n, tn)

    itemsize = jnp.dtype(logits.dtype).itemsize
    cost = pl.CostEstimate(
        flops=6 * n * c,
        transcendentals=n * c + 2 * n,        # lse exp (N*C) + log + p_t exp
        bytes_accessed=n * c * itemsize + n * 4 + 4,
    )

    kernel = functools.partial(_focal_loss_kernel, n_rows=n, inv_n=1.0 / n)

    out = pl.pallas_call(
        kernel,
        out_shape=jax.ShapeDtypeStruct((1, 1), jnp.float32),
        grid_spec=pltpu.PrefetchScalarGridSpec(
            num_scalar_prefetch=0,
            grid=(grid,),
            in_specs=[
                pl.BlockSpec((tn, c), lambda i: (i, 0)),   # logits row tile
                pl.BlockSpec((tn, 1), lambda i: (i, 0)),   # target row tile
            ],
            out_specs=pl.BlockSpec((1, 1), lambda i: (0, 0)),
            scratch_shapes=[pltpu.VMEM((1, 1), jnp.float32)],
        ),
        compiler_params=pltpu.CompilerParams(
            # running-sum accumulator across the row axis -> arbitrary
            dimension_semantics=("arbitrary",)),
        cost_estimate=cost,
    )(logits, t2d)
    return out[0, 0]


def _focal_loss_ref(logits, targets):
    # Plain-JAX reference matching the PyTorch module.
    log_prob = jax.nn.log_softmax(logits.astype(jnp.float32), axis=-1)
    prob = jnp.exp(log_prob)
    focal = ((1.0 - prob) ** GAMMA) * log_prob
    picked = jnp.take_along_axis(
        focal, targets[:, None].astype(jnp.int32), axis=-1)[:, 0]
    return -jnp.mean(picked)


if __name__ == "__main__":
    key = jax.random.PRNGKey(0)
    k1, k2, k3, k4 = jax.random.split(key, 4)

    # 1) Small single-tile case (batch=8, classes=32).
    N, C = 8, 32
    logits = jax.random.normal(k1, (N, C), dtype=jnp.float32)
    targets = jax.random.randint(k2, (N,), 0, C, dtype=jnp.int32)
    loss = focal_loss(logits, targets)
    jax.block_until_ready(loss)
    ref = _focal_loss_ref(logits, targets)
    assert jnp.allclose(loss, ref, atol=1e-5, rtol=1e-5), (loss, ref)

    # 2) Multi-tile case with a ragged last tile (exercises the grid pipeline,
    #    row masking and the running-sum accumulator).
    N2, C2 = 200, 40
    logits2 = jax.random.normal(k3, (N2, C2), dtype=jnp.float32)
    targets2 = jax.random.randint(k4, (N2,), 0, C2, dtype=jnp.int32)
    loss2 = focal_loss(logits2, targets2, block_rows=64)
    jax.block_until_ready(loss2)
    ref2 = _focal_loss_ref(logits2, targets2)
    assert jnp.allclose(loss2, ref2, atol=1e-5, rtol=1e-5), (loss2, ref2)

    print("KERNEL_OK")
</pallas_src>

<mosaic_0001>
module attributes {stable_mosaic.version = 11 : i64} {
  func.func @_focal_loss_kernel(%arg0: i32, %arg1: memref<8x32xf32, #tpu.memory_space<vmem>>, %arg2: memref<8x1xi32, #tpu.memory_space<vmem>>, %arg3: memref<1x1xf32, #tpu.memory_space<vmem>>, %arg4: memref<1x1xf32, #tpu.memory_space<vmem>>) attributes {dimension_semantics = [#tpu.dimension_semantics<arbitrary>], iteration_bounds = array<i64: 1>, scalar_prefetch = 0 : i64, scratch_operands = 1 : i64, tpu.core_type = #tpu.core_type<tc>, window_params = [{transform_indices = @transform_0, window_bounds = array<i64: 8, 32>}, {transform_indices = @transform_1, window_bounds = array<i64: 8, 1>}, {pipeline_mode = #tpu.pipeline_mode<synchronous>, transform_indices = @transform_2, window_bounds = array<i64: 1, 1>}]} {
    %c0_i32 = arith.constant 0 : i32
    %0 = arith.cmpi eq, %arg0, %c0_i32 : i32
    %1 = arith.extui %0 : i1 to i32
    %c0_i32_0 = arith.constant 0 : i32
    %2 = arith.cmpi ne, %1, %c0_i32_0 : i32
    scf.if %2 {
      %cst_17 = arith.constant 0.000000e+00 : f32
      %45 = vector.broadcast %cst_17 : f32 to vector<1x1xf32>
      %c0_18 = arith.constant 0 : index
      %c0_19 = arith.constant 0 : index
      %46 = vector.load %arg4[%c0_18, %c0_19] : memref<1x1xf32, #tpu.memory_space<vmem>>, vector<1x1xf32>
      tpu.vector_store %arg4[%c0_18, %c0_19], %45 {strides = array<i32>} : memref<1x1xf32, #tpu.memory_space<vmem>>, vector<1x1xf32>,
    } else {
    }
    %c0 = arith.constant 0 : index
    %c0_1 = arith.constant 0 : index
    %3 = vector.load %arg1[%c0, %c0_1] : memref<8x32xf32, #tpu.memory_space<vmem>>, vector<8x32xf32>
    %cst = arith.constant dense<0xFF800000> : vector<8xf32>
    %4 = vector.multi_reduction <maximumf>, %3, %cst [1] : vector<8x32xf32> to vector<8xf32>
    %5 = vector.shape_cast %4 : vector<8xf32> to vector<8x1xf32>
    %6 = vector.broadcast %5 : vector<8x1xf32> to vector<8x32xf32>
    %7 = arith.subf %3, %6 : vector<8x32xf32>
    %8 = math.exp %7 : vector<8x32xf32>
    %cst_2 = arith.constant dense<0.000000e+00> : vector<8xf32>
    %9 = vector.multi_reduction <add>, %8, %cst_2 [1] : vector<8x32xf32> to vector<8xf32>
    %10 = vector.shape_cast %9 : vector<8xf32> to vector<8x1xf32>
    %11 = math.log %10 : vector<8x1xf32>
    %c0_3 = arith.constant 0 : index
    %c0_4 = arith.constant 0 : index
    %12 = vector.load %arg2[%c0_3, %c0_4] : memref<8x1xi32, #tpu.memory_space<vmem>>, vector<8x1xi32>
    %13 = tpu.iota {dimensions = array<i32: 1>} : vector<8x32xi32>
    %14 = vector.broadcast %12 : vector<8x1xi32> to vector<8x32xi32>
    %15 = arith.cmpi eq, %13, %14 : vector<8x32xi32>
    %cst_5 = arith.constant 0.000000e+00 : f32
    %16 = vector.broadcast %cst_5 : f32 to vector<8x32xf32>
    %17 = arith.select %15, %7, %16 : vector<8x32xi1>, vector<8x32xf32>
    %cst_6 = arith.constant dense<0.000000e+00> : vector<8xf32>
    %18 = vector.multi_reduction <add>, %17, %cst_6 [1] : vector<8x32xf32> to vector<8xf32>
    %19 = vector.shape_cast %18 : vector<8xf32> to vector<8x1xf32>
    %20 = arith.subf %19, %11 : vector<8x1xf32>
    %21 = math.exp %20 : vector<8x1xf32>
    %cst_7 = arith.constant 1.000000e+00 : f32
    %22 = vector.broadcast %cst_7 : f32 to vector<8x1xf32>
    %23 = arith.subf %22, %21 : vector<8x1xf32>
    %24 = arith.mulf %23, %23 : vector<8x1xf32>
    %25 = arith.mulf %24, %20 : vector<8x1xf32>
    %26 = tpu.iota {dimensions = array<i32: 0>} : vector<8x1xi32>
    %c8_i32 = arith.constant 8 : i32
    %27 = arith.muli %arg0, %c8_i32 : i32
    %28 = vector.broadcast %27 : i32 to vector<8x1xi32>
    %29 = arith.addi %26, %28 : vector<8x1xi32>
    %c8_i32_8 = arith.constant 8 : i32
    %30 = vector.broadcast %c8_i32_8 : i32 to vector<8x1xi32>
    %31 = arith.cmpi slt, %29, %30 : vector<8x1xi32>
    %cst_9 = arith.constant 0.000000e+00 : f32
    %32 = vector.broadcast %cst_9 : f32 to vector<8x1xf32>
    %33 = arith.select %31, %25, %32 : vector<8x1xi1>, vector<8x1xf32>
    %c0_10 = arith.constant 0 : index
    %c0_11 = arith.constant 0 : index
    %34 = vector.load %arg4[%c0_10, %c0_11] : memref<1x1xf32, #tpu.memory_space<vmem>>, vector<1x1xf32>
    %35 = vector.shape_cast %33 : vector<8x1xf32> to vector<1x8x1xf32>
    %cst_12 = arith.constant dense<0.000000e+00> : vector<1xf32>
    %36 = vector.multi_reduction <add>, %35, %cst_12 [1, 2] : vector<1x8x1xf32> to vector<1xf32>
    %37 = vector.shape_cast %36 : vector<1xf32> to vector<1x1x1xf32>
    %38 = vector.extract %37[0, 0, 0] : f32 from vector<1x1x1xf32>
    %39 = vector.broadcast %38 : f32 to vector<1x1xf32>
    %40 = arith.addf %34, %39 : vector<1x1xf32>
    %c0_13 = arith.constant 0 : index
    %c0_14 = arith.constant 0 : index
    %41 = vector.load %arg4[%c0_13, %c0_14] : memref<1x1xf32, #tpu.memory_space<vmem>>, vector<1x1xf32>
    tpu.vector_store %arg4[%c0_13, %c0_14], %40 {strides = array<i32>} : memref<1x1xf32, #tpu.memory_space<vmem>>, vector<1x1xf32>,
    %c0_i32_15 = arith.constant 0 : i32
    %42 = arith.cmpi eq, %arg0, %c0_i32_15 : i32
    %43 = arith.extui %42 : i1 to i32
    %c0_i32_16 = arith.constant 0 : i32
    %44 = arith.cmpi ne, %43, %c0_i32_16 : i32
    scf.if %44 {
      %c0_17 = arith.constant 0 : index
      %c0_18 = arith.constant 0 : index
      %45 = vector.load %arg4[%c0_17, %c0_18] : memref<1x1xf32, #tpu.memory_space<vmem>>, vector<1x1xf32>
      %cst_19 = arith.constant -1.250000e-01 : f32
      %46 = vector.broadcast %cst_19 : f32 to vector<1x1xf32>
      %47 = arith.mulf %45, %46 : vector<1x1xf32>
      %c0_20 = arith.constant 0 : index
      %c0_21 = arith.constant 0 : index
      %48 = vector.load %arg3[%c0_20, %c0_21] : memref<1x1xf32, #tpu.memory_space<vmem>>, vector<1x1xf32>
      tpu.vector_store %arg3[%c0_20, %c0_21], %47 {strides = array<i32>} : memref<1x1xf32, #tpu.memory_space<vmem>>, vector<1x1xf32>,
    } else {
    }
    return
  }
  func.func @transform_0(%arg0: i32) -> (i32, i32) {
    %c0_i32 = arith.constant 0 : i32
    %c0_i32_0 = arith.constant 0 : i32
    return %arg0, %c0_i32 : i32, i32
  }
  func.func @transform_1(%arg0: i32) -> (i32, i32) {
    %c0_i32 = arith.constant 0 : i32
    %c0_i32_0 = arith.constant 0 : i32
    return %arg0, %c0_i32 : i32, i32
  }
  func.func @transform_2(%arg0: i32) -> (i32, i32) {
    %c0_i32 = arith.constant 0 : i32
    %c0_i32_0 = arith.constant 0 : i32
    %c0_i32_1 = arith.constant 0 : i32
    return %c0_i32, %c0_i32_0 : i32, i32
  }
}

</mosaic_0001>

<llo_original>
// kernel: tpu_custom_call.1
$region0: #{tpu_custom_call.1}
  #allocation0 [shape = 'u32[]', space=smem, size = 0x4, offset = 0x4, fixed_abs, tag = 'smem constant byte address 0x4 - core index']
  #allocation1 [shape = 'u32[72,128]{1,0:T(1,128)}', space=vmem, size = 0x9000, scoped, tag = 'internal scratch']
  #allocation2 [shape = 'f32[1,1]{1,0:T(1,128)}', space=vmem, size = 0x200, scoped, tag = 'scratch operand']
  %s0 = inlined_call_operand.vmem [shape: f32[8,32], index: 0, kind: input, shape index: {}]
  %s1 = inlined_call_operand.vmem [shape: s32[8,1], index: 1, kind: input, shape index: {}]
  %s2 = inlined_call_operand.hbm [shape: f32[1,1], index: 2, kind: output, shape index: {}]
  %s3 = sld [smem:[#allocation0]]
  $region26: #{tpu_custom_call.1} parent=0
    _
  %s5 = ssub.s32 1, %s3
  %s6 = scalar_select 0, %s5, %s3
  $region1: #{tpu_custom_call.1} parent=0
    #allocation3 [shape = 'u8[512]{0}', space=vmem, size = 0x400, scoped, tag = 'output window, operand 0, single buffered']
    #allocation4 [shape = 's32[1]{0}', space=sflag, size = 0x4, scoped, tag = 'scoped memory for tpu_custom_call.1']
    %7 = vsyncpa [#allocation4], 0
    // Predicated region
    $region2: #{tpu_custom_call.1} parent=1 // pred_check
      _
    $region3: #{tpu_custom_call.1} parent=1 // pred_check_branch
      %9 = sbr.rel (0) target = $region5
    $region4: #{tpu_custom_call.1} parent=1 // pred_region
      _
    $region5: #{tpu_custom_call.1} parent=1 // pred_fallthru
      _
    // Predicated region
    $region6: #{tpu_custom_call.1} parent=1 // pred_check
      _
    $region7: #{tpu_custom_call.1} parent=1 // pred_check_branch
      %11 = sbr.rel (0) target = $region9
    $region8: #{tpu_custom_call.1} parent=1 // pred_region
      _
    $region9: #{tpu_custom_call.1} parent=1 // pred_fallthru
      _
    %p12 = scmp.eq.s32.totalorder 0, 0
    // Predicated region
    $region10: #{tpu_custom_call.1} parent=1 // pred_check
      %p13 = pneg %p12
    $region11: #{tpu_custom_call.1} parent=1 // pred_check_branch
      %15 = sbr.rel (%p13) target = $region13
    $region12: #{tpu_custom_call.1} parent=1 // pred_region
      %vm16 = vcmask 0
      %17 = vst.msk [vmem:[#allocation2] sm:$0x1] %vm16, 0.0
    $region13: #{tpu_custom_call.1} parent=1 // pred_fallthru
      _
    %v18 = vld [vmem:[%s0] sm:$0xff]
    %vm19 = vcmask 261120
    %v20 = vsel %vm19, %v18, -inf
    %21 = vmax.xlane.f32.xlu0 %v20
    %v22 = vpop.xlane.xlu0 %21
    %v23 = vsub.f32 %v18, %v22
    %v24 = vmul.f32 %v23, 1.442695
    %v25 = vpow.pop %v24
    %v26 = vsel %vm19, %v25, 0.0
    %27 = vadd.xlane.f32.xlu0 %v26
    %v28 = vpop.xlane.xlu0 %27
    %v29 = vlog2.pop %v28
    %v30 = vmul.f32 %v29, 0.6931472
    %v31 = vld [vmem:[%s1] sm:$0xff]
    %v32 = vlaneseq
    %v33 = vand.u32 %v32, 127
    %34 = vset.pattern.permute.xlu0 0
    %35 = vperm.xlu0 %34, %v31
    %v36 = vpop.permute.xlu0 %35
    %vm37 = vcmp.eq.s32.totalorder %v33, %v36
    %v38 = vsel %vm37, %v23, 0.0
    %v39 = vsel %vm19, %v38, 0.0
    %40 = vadd.xlane.f32.xlu0 %v39
    %v41 = vpop.xlane.xlu0 %40
    %v42 = vsub.f32 %v41, %v30
    %v43 = vmul.f32 %v42, 1.442695
    %v44 = vpow.pop %v43
    %v45 = vsub.f32 1.0, %v44
    %v46 = vmul.f32 %v45, %v45
    %v47 = vmul.f32 %v46, %v42
    %v48 = vlaneseq
    %v49 = vshrl.u32 %v48, 7
    %s50 = smul.u32 0, 8
    %v51 = vstv %s50
    %v52 = vadd.s32 %v49, %v51
    %vm53 = vcmp.lt.s32.totalorder %v52, 8
    %v54 = vsel %vm53, %v47, 0.0
    %v55 = vld [vmem:[#allocation2] sm:$0x1]
    %vm56 = vcmask 7168
    %v57 = vsel %vm56, %v54, 0.0
    %58 = vadd.xlane.f32.xlu0 %v57
    %v59 = vpop.xlane.xlu0 %58
    %v60 = vrot.slane %v59, 4
    %v61 = vadd.f32 %v59, %v60
    %v62 = vrot.slane %v61, 2
    %v63 = vadd.f32 %v61, %v62
    %v64 = vrot.slane %v63, 1
    %v65 = vadd.f32 %v63, %v64
    %s66 = vtos %v65
    %v67 = vstv %s66
    %v68 = vadd.f32 %v55, %v67
    %vm69 = vcmask 0
    %70 = vst.msk [vmem:[#allocation2] sm:$0x1] %vm69, %v68
    // Predicated region
    $region14: #{tpu_custom_call.1} parent=1 // pred_check
      %p71 = pneg %p12
    $region15: #{tpu_custom_call.1} parent=1 // pred_check_branch
      %73 = sbr.rel (%p71) target = $region17
    $region16: #{tpu_custom_call.1} parent=1 // pred_region
      %v74 = vld [vmem:[#allocation2] sm:$0x1]
      %v75 = vmul.f32 %v74, -0.125
      %76 = vst.msk [vmem:[#allocation3] sm:$0x1] %vm69, %v75
    $region17: #{tpu_custom_call.1} parent=1 // pred_fallthru
      _
    // Predicated region
    $region18: #{tpu_custom_call.1} parent=1 // pred_check
      _
    $region19: #{tpu_custom_call.1} parent=1 // pred_check_branch
      %78 = sbr.rel (0) target = $region21
    $region20: #{tpu_custom_call.1} parent=1 // pred_region
      %80 = vsyncadd [#allocation4], 0
      %s82 = sshll.u32 [#allocation3], 4
      %s83 = int_to_ptr.vmem [resolvable:$true] %s82
      %s84 = sshll.u32 %s2, 4
      %s85 = int_to_ptr.hbm [resolvable:$true] %s84
      %87 = dma.vmem_to_hbm [thread:$0]  %s83, 16, %s85, [#allocation4]
    $region21: #{tpu_custom_call.1} parent=1 // pred_fallthru
      _
    // Predicated region
    $region22: #{tpu_custom_call.1} parent=1 // pred_check
      _
    $region23: #{tpu_custom_call.1} parent=1 // pred_check_branch
      %89 = sbr.rel (0) target = $region25
    $region24: #{tpu_custom_call.1} parent=1 // pred_region
      %91 = dma.done [#allocation4], 16
    $region25: #{tpu_custom_call.1} parent=1 // pred_fallthru
      _
    %92 = vsyncpa [#allocation4], 1

</llo_original>
